<compile_context>
chip_gen: v5e
topology: v5e:2x2
jax: 0.10.0
libtpu: 0.0.40
codegen_flags: <defaults>
</compile_context>

<pallas_src>
import functools
import math
from typing import NamedTuple

import jax
import jax.numpy as jnp
from jax.experimental import pallas as pl
from jax.experimental.pallas import tpu as pltpu


# ---------------------------------------------------------------------------
# Fused kernel: chained sigmoid(x @ W_i + b_i), final layer is a plain Linear.
# ---------------------------------------------------------------------------
def _fused_dbn_kernel(x_ref, *refs, n_layers: int):
    # refs = (w0, b0, w1, b1, ..., w_{L-1}, b_{L-1}, o_ref)
    o_ref = refs[-1]
    act = x_ref[...].astype(jnp.bfloat16)             # on-chip cast (fast path)
    for i in range(n_layers):
        w = refs[2 * i][...]                          # bf16 resident weights
        b = refs[2 * i + 1][...]                      # f32 (1, H) bias
        z = jnp.dot(act, w, preferred_element_type=jnp.float32) + b
        if i < n_layers - 1:
            # Exact sigmoid via tanh: single EUP op per element, no approx error.
            act = (0.5 * jnp.tanh(0.5 * z) + 0.5).astype(jnp.bfloat16)
        else:
            o_ref[...] = z.astype(o_ref.dtype)        # bpnn: no activation


# ---------------------------------------------------------------------------
# Small helpers
# ---------------------------------------------------------------------------
def _round_up(x, m):
    return (x + m - 1) // m * m


def _tpu_generation():
    """Best-effort TPU generation from device_kind (5, 6 or 7)."""
    try:
        kind = jax.devices()[0].device_kind.lower()
    except Exception:
        return 6
    for g in (7, 6, 5, 4):
        if str(g) in kind:
            return g
    return 6


def _vmem_capacity_bytes(generation):
    try:
        return int(pltpu.get_tpu_info().vmem_capacity_bytes)
    except Exception:
        # v7x has 64 MiB per TensorCore; v5e/v6e have 128 MiB.
        return (64 if generation >= 7 else 128) * 1024 * 1024


def _pick_batch_tiling(batch, generation):
    """Pad the batch to a 16 multiple (bf16 sublane packing) and pick a tile.

    Small batch: one tile covering the whole batch (no per-grid-step overhead).
    Large batch: generation-aware tiles — 128 rows on v5e, 256 rows on v6e for
    pB >= 512 (fills the 256-wide MXU), and an even >=2 parallel step count on
    v7x so both TensorCores share the grid evenly.
    """
    pb = _round_up(batch, 16)
    single_tile_limit = 128 if generation >= 7 else 256
    if pb <= single_tile_limit:
        return pb, pb
    if generation <= 5:
        tile = 128                       # 4x128 MXU, 1 vst slot, small VMEM
    elif generation == 6:
        tile = 256 if pb >= 512 else 128
    else:                                # v7x
        tile = 256 if pb > 2048 else 128
    pb = _round_up(pb, tile)
    if generation >= 7 and (pb // tile) % 2 == 1:
        pb += tile                       # even step count for the 2 TCs
    return pb, tile


class _FwdConfig(NamedTuple):
    n_layers: int
    out_feats: int
    pad_dims: tuple        # padded feature widths, length n_layers + 1
    generation: int
    vmem_cap: int
    out_dtype: str         # "float32" (default) or "bfloat16" to halve writeback


# ---------------------------------------------------------------------------
# One-time parameter preparation (padding + bf16 cast hoisted out of forward)
# ---------------------------------------------------------------------------
def prepare_dbn_params(params, *, out_dtype="float32"):
    weights = list(params["rbm_w"]) + [params["bpnn_w"]]
    biases = list(params["rbm_hb"]) + [params["bpnn_b"]]
    n_layers = len(weights)
    in_feats = weights[0].shape[0]
    out_feats = weights[-1].shape[1]

    # Lane-dense padded widths for every feature axis (multiples of 128).
    pad_dims = [_round_up(in_feats, 128)]
    for w in weights:
        pad_dims.append(_round_up(w.shape[1], 128))

    # Zero-padded weight rows guarantee the padded activation columns
    # (sigmoid(0) = 0.5) contribute exactly 0 downstream.
    flat = []
    for i, (w, b) in enumerate(zip(weights, biases)):
        k, h = w.shape
        wp = jnp.zeros((pad_dims[i], pad_dims[i + 1]), jnp.bfloat16)
        wp = wp.at[:k, :h].set(w.astype(jnp.bfloat16))
        bp = jnp.zeros((1, pad_dims[i + 1]), jnp.float32)
        bp = bp.at[0, :h].set(b.astype(jnp.float32))
        flat += [wp, bp]

    gen = _tpu_generation()
    cfg = _FwdConfig(n_layers=n_layers, out_feats=out_feats,
                     pad_dims=tuple(pad_dims), generation=gen,
                     vmem_cap=_vmem_capacity_bytes(gen), out_dtype=out_dtype)
    return {"cfg": cfg, "flat": tuple(flat)}


# ---------------------------------------------------------------------------
# Jitted forward implementation
# ---------------------------------------------------------------------------
@functools.partial(jax.jit, static_argnums=(0, 1))
def _dbn_forward_impl(cfg, single_buffer, x, *flat):
    n_layers = cfg.n_layers
    weights = flat[0::2]
    biases = flat[1::2]
    out_dt = jnp.dtype(cfg.out_dtype)

    B, in_feats = x.shape
    pad_in = cfg.pad_dims[0]
    pad_out = cfg.pad_dims[-1]
    pB, tile_m = _pick_batch_tiling(B, cfg.generation)

    # Fast path: feed x straight to the kernel (f32, cast to bf16 on-chip).
    direct = (B == pB) and (in_feats == pad_in)
    if direct:
        x_in = x
    else:
        x_in = jnp.zeros((pB, pad_in), jnp.bfloat16)
        x_in = x_in.at[:B, :in_feats].set(x.astype(jnp.bfloat16))

    def _resident_spec(shape):
        # Constant index_map across the grid -> single buffer is enough.
        if single_buffer:
            return pl.BlockSpec(shape, lambda g: (0, 0),
                                pipeline_mode=pl.Buffered(1))
        return pl.BlockSpec(shape, lambda g: (0, 0))

    in_specs = [pl.BlockSpec((tile_m, pad_in), lambda g: (g, 0))]
    operands = [x_in]
    for w, b in zip(weights, biases):
        in_specs.append(_resident_spec(w.shape))
        in_specs.append(_resident_spec(b.shape))
        operands.append(w)
        operands.append(b)

    # --- per-generation VMEM accounting -> budget check + scoped-vmem limit ---
    buf_factor = 1 if single_buffer else 2
    param_bytes = sum(w.size * w.dtype.itemsize + b.size * b.dtype.itemsize
                      for w, b in zip(weights, biases))
    resident = buf_factor * param_bytes
    io_bytes = 2 * tile_m * (pad_in * x_in.dtype.itemsize
                             + pad_out * out_dt.itemsize)
    budget = int(0.6 * cfg.vmem_cap)     # leave room for I/O buffers + scratch
    if resident > budget:
        # TODO(synk): add a K/H-tiled fallback (grid over K, f32 VMEM
        # accumulator, pl.when init/finalize) for layer widths whose resident
        # weights exceed the per-generation fused-path budget.
        raise ValueError("DBN weights too large for the fused VMEM-resident path")
    vmem_limit = min(int(0.9 * cfg.vmem_cap),
                     max(32 * 1024 * 1024,
                         resident + io_bytes + 8 * 1024 * 1024))

    flops = 2 * pB * sum(cfg.pad_dims[i] * cfg.pad_dims[i + 1]
                         for i in range(n_layers))
    transcendentals = pB * sum(cfg.pad_dims[i + 1] for i in range(n_layers - 1))
    bytes_accessed = (x_in.size * x_in.dtype.itemsize + param_bytes
                      + pB * pad_out * out_dt.itemsize)

    out_padded = pl.pallas_call(
        functools.partial(_fused_dbn_kernel, n_layers=n_layers),
        out_shape=jax.ShapeDtypeStruct((pB, pad_out), out_dt),
        grid_spec=pltpu.PrefetchScalarGridSpec(
            num_scalar_prefetch=0,
            grid=(pB // tile_m,),
            in_specs=in_specs,
            out_specs=pl.BlockSpec((tile_m, pad_out), lambda g: (g, 0)),
        ),
        compiler_params=pltpu.CompilerParams(
            dimension_semantics=("parallel",),
            vmem_limit_bytes=vmem_limit),
        cost_estimate=pl.CostEstimate(
            flops=flops, transcendentals=transcendentals,
            bytes_accessed=bytes_accessed),
    )(*operands)

    return out_padded[:B, :cfg.out_feats]


# Cached decision: does this JAX/Mosaic build accept pipeline_mode=Buffered(1)?
_SINGLE_BUFFER_WEIGHTS = None


def dbn_forward(prepared, x):
    """Fused DBN forward on prepared (pre-padded, pre-cast) parameters."""
    global _SINGLE_BUFFER_WEIGHTS
    cfg, flat = prepared["cfg"], prepared["flat"]
    if _SINGLE_BUFFER_WEIGHTS is None:
        try:
            out = _dbn_forward_impl(cfg, True, x, *flat)
            _SINGLE_BUFFER_WEIGHTS = True
            return out
        except Exception:
            # pipeline_mode / Buffered(1) unsupported: fall back to default
            # double-buffered resident weights (still correct, slightly more VMEM).
            _SINGLE_BUFFER_WEIGHTS = False
    return _dbn_forward_impl(cfg, _SINGLE_BUFFER_WEIGHTS, x, *flat)


# ---------------------------------------------------------------------------
# Parameter construction (deterministic, mirrors the PyTorch __init__ shapes)
# ---------------------------------------------------------------------------
def make_dbn_params(key, input_units, hidden_units, output_units):
    params = {"rbm_w": [], "rbm_hb": []}
    n_in = input_units
    for h in hidden_units:
        key, sub = jax.random.split(key)
        # xavier_uniform_ with gain = calculate_gain('sigmoid') = 1.0
        limit = math.sqrt(6.0 / (n_in + h))
        w = jax.random.uniform(sub, (n_in, h), jnp.float32, -limit, limit)
        hb = jnp.zeros((h,), jnp.float32)             # nn.init.zeros_(h_bias)
        params["rbm_w"].append(w)
        params["rbm_hb"].append(hb)
        n_in = h
    # bpnn = nn.Linear(hidden_units[-1], output_units): default PyTorch init,
    # stored as (in, out) so forward is x @ W.
    fan_in = hidden_units[-1]
    bound = 1.0 / math.sqrt(fan_in)
    key, k1, k2 = jax.random.split(key, 3)
    params["bpnn_w"] = jax.random.uniform(
        k1, (fan_in, output_units), jnp.float32, -bound, bound)
    params["bpnn_b"] = jax.random.uniform(
        k2, (output_units,), jnp.float32, -bound, bound)
    return params


# ---------------------------------------------------------------------------
if __name__ == "__main__":
    # Small, forward-consistent shapes: flat feature vectors (module defaults).
    batch = 16
    input_units = 256
    hidden_units = [128, 64]
    output_units = 1

    key = jax.random.PRNGKey(0)
    key, kx = jax.random.split(key)
    x = jax.random.uniform(kx, (batch, input_units), jnp.float32)

    params = make_dbn_params(key, input_units, hidden_units, output_units)
    prepared = prepare_dbn_params(params)        # one-time pad + bf16 cast

    y = dbn_forward(prepared, x)
    jax.block_until_ready(y)
    assert y.shape == (batch, output_units)

    # Pure-JAX reference mirroring the kernel's bf16 MXU inputs (f32 accumulate,
    # exact sigmoid).  Note: bf16 matmul inputs are a deliberate deviation from
    # PyTorch's f32 matmuls.
    ref = x.astype(jnp.bfloat16)
    for w, hb in zip(params["rbm_w"], params["rbm_hb"]):
        z = jnp.dot(ref, w.astype(jnp.bfloat16),
                    preferred_element_type=jnp.float32) + hb
        ref = jax.nn.sigmoid(z).astype(jnp.bfloat16)
    ref = jnp.dot(ref, params["bpnn_w"].astype(jnp.bfloat16),
                  preferred_element_type=jnp.float32) + params["bpnn_b"]

    assert jnp.allclose(y, ref, atol=3e-3, rtol=3e-3), (
        float(jnp.max(jnp.abs(y - ref))))

    print("KERNEL_OK")
</pallas_src>

<mosaic_0001>
module attributes {stable_mosaic.version = 11 : i64} {
  func.func @_fused_dbn_kernel(%arg0: i32, %arg1: memref<16x256xf32, #tpu.memory_space<vmem>>, %arg2: memref<256x128xbf16, #tpu.memory_space<vmem>>, %arg3: memref<1x128xf32, #tpu.memory_space<vmem>>, %arg4: memref<128x128xbf16, #tpu.memory_space<vmem>>, %arg5: memref<1x128xf32, #tpu.memory_space<vmem>>, %arg6: memref<128x128xbf16, #tpu.memory_space<vmem>>, %arg7: memref<1x128xf32, #tpu.memory_space<vmem>>, %arg8: memref<16x128xf32, #tpu.memory_space<vmem>>) attributes {dimension_semantics = [#tpu.dimension_semantics<parallel>], iteration_bounds = array<i64: 1>, scalar_prefetch = 0 : i64, scratch_operands = 0 : i64, tpu.core_type = #tpu.core_type<tc>, window_params = [{transform_indices = @transform_0, window_bounds = array<i64: 16, 256>}, {pipeline_mode = #tpu.pipeline_mode<synchronous>, transform_indices = @transform_1, window_bounds = array<i64: 256, 128>}, {pipeline_mode = #tpu.pipeline_mode<synchronous>, transform_indices = @transform_2, window_bounds = array<i64: 1, 128>}, {pipeline_mode = #tpu.pipeline_mode<synchronous>, transform_indices = @transform_3, window_bounds = array<i64: 128, 128>}, {pipeline_mode = #tpu.pipeline_mode<synchronous>, transform_indices = @transform_4, window_bounds = array<i64: 1, 128>}, {pipeline_mode = #tpu.pipeline_mode<synchronous>, transform_indices = @transform_5, window_bounds = array<i64: 128, 128>}, {pipeline_mode = #tpu.pipeline_mode<synchronous>, transform_indices = @transform_6, window_bounds = array<i64: 1, 128>}, {transform_indices = @transform_7, window_bounds = array<i64: 16, 128>}]} {
    %c0 = arith.constant 0 : index
    %c0_0 = arith.constant 0 : index
    %0 = vector.load %arg1[%c0, %c0_0] : memref<16x256xf32, #tpu.memory_space<vmem>>, vector<16x256xf32>
    %1 = arith.truncf %0 : vector<16x256xf32> to vector<16x256xbf16>
    %c0_1 = arith.constant 0 : index
    %c0_2 = arith.constant 0 : index
    %2 = vector.load %arg2[%c0_1, %c0_2] : memref<256x128xbf16, #tpu.memory_space<vmem>>, vector<256x128xbf16>
    %c0_3 = arith.constant 0 : index
    %c0_4 = arith.constant 0 : index
    %3 = vector.load %arg3[%c0_3, %c0_4] : memref<1x128xf32, #tpu.memory_space<vmem>>, vector<1x128xf32>
    %cst = arith.constant dense<0.000000e+00> : vector<16x128xf32>
    %4 = tpu.matmul %1, %2, %cst {dimension_numbers = #tpu.dot_dimension_numbers<[1], [0], [0], [1], [0, 0, 1, 1], [], []>} : vector<16x256xbf16>, vector<256x128xbf16>, vector<16x128xf32> -> vector<16x128xf32>
    %5 = vector.broadcast %3 : vector<1x128xf32> to vector<16x128xf32>
    %6 = arith.addf %4, %5 : vector<16x128xf32>
    %cst_5 = arith.constant 5.000000e-01 : f32
    %7 = vector.broadcast %cst_5 : f32 to vector<16x128xf32>
    %8 = arith.mulf %7, %6 : vector<16x128xf32>
    %9 = math.tanh %8 : vector<16x128xf32>
    %cst_6 = arith.constant 5.000000e-01 : f32
    %10 = vector.broadcast %cst_6 : f32 to vector<16x128xf32>
    %11 = arith.mulf %10, %9 : vector<16x128xf32>
    %cst_7 = arith.constant 5.000000e-01 : f32
    %12 = vector.broadcast %cst_7 : f32 to vector<16x128xf32>
    %13 = arith.addf %11, %12 : vector<16x128xf32>
    %14 = arith.truncf %13 : vector<16x128xf32> to vector<16x128xbf16>
    %c0_8 = arith.constant 0 : index
    %c0_9 = arith.constant 0 : index
    %15 = vector.load %arg4[%c0_8, %c0_9] : memref<128x128xbf16, #tpu.memory_space<vmem>>, vector<128x128xbf16>
    %c0_10 = arith.constant 0 : index
    %c0_11 = arith.constant 0 : index
    %16 = vector.load %arg5[%c0_10, %c0_11] : memref<1x128xf32, #tpu.memory_space<vmem>>, vector<1x128xf32>
    %cst_12 = arith.constant dense<0.000000e+00> : vector<16x128xf32>
    %17 = tpu.matmul %14, %15, %cst_12 {dimension_numbers = #tpu.dot_dimension_numbers<[1], [0], [0], [1], [0, 0, 1, 1], [], []>} : vector<16x128xbf16>, vector<128x128xbf16>, vector<16x128xf32> -> vector<16x128xf32>
    %18 = vector.broadcast %16 : vector<1x128xf32> to vector<16x128xf32>
    %19 = arith.addf %17, %18 : vector<16x128xf32>
    %cst_13 = arith.constant 5.000000e-01 : f32
    %20 = vector.broadcast %cst_13 : f32 to vector<16x128xf32>
    %21 = arith.mulf %20, %19 : vector<16x128xf32>
    %22 = math.tanh %21 : vector<16x128xf32>
    %cst_14 = arith.constant 5.000000e-01 : f32
    %23 = vector.broadcast %cst_14 : f32 to vector<16x128xf32>
    %24 = arith.mulf %23, %22 : vector<16x128xf32>
    %cst_15 = arith.constant 5.000000e-01 : f32
    %25 = vector.broadcast %cst_15 : f32 to vector<16x128xf32>
    %26 = arith.addf %24, %25 : vector<16x128xf32>
    %27 = arith.truncf %26 : vector<16x128xf32> to vector<16x128xbf16>
    %c0_16 = arith.constant 0 : index
    %c0_17 = arith.constant 0 : index
    %28 = vector.load %arg6[%c0_16, %c0_17] : memref<128x128xbf16, #tpu.memory_space<vmem>>, vector<128x128xbf16>
    %c0_18 = arith.constant 0 : index
    %c0_19 = arith.constant 0 : index
    %29 = vector.load %arg7[%c0_18, %c0_19] : memref<1x128xf32, #tpu.memory_space<vmem>>, vector<1x128xf32>
    %cst_20 = arith.constant dense<0.000000e+00> : vector<16x128xf32>
    %30 = tpu.matmul %27, %28, %cst_20 {dimension_numbers = #tpu.dot_dimension_numbers<[1], [0], [0], [1], [0, 0, 1, 1], [], []>} : vector<16x128xbf16>, vector<128x128xbf16>, vector<16x128xf32> -> vector<16x128xf32>
    %31 = vector.broadcast %29 : vector<1x128xf32> to vector<16x128xf32>
    %32 = arith.addf %30, %31 : vector<16x128xf32>
    %c0_21 = arith.constant 0 : index
    %c0_22 = arith.constant 0 : index
    %33 = vector.load %arg8[%c0_21, %c0_22] : memref<16x128xf32, #tpu.memory_space<vmem>>, vector<16x128xf32>
    tpu.vector_store %arg8[%c0_21, %c0_22], %32 {strides = array<i32>} : memref<16x128xf32, #tpu.memory_space<vmem>>, vector<16x128xf32>,
    return
  }
  func.func @transform_0(%arg0: i32) -> (i32, i32) {
    %c0_i32 = arith.constant 0 : i32
    %c0_i32_0 = arith.constant 0 : i32
    return %arg0, %c0_i32 : i32, i32
  }
  func.func @transform_1(%arg0: i32) -> (i32, i32) {
    %c0_i32 = arith.constant 0 : i32
    %c0_i32_0 = arith.constant 0 : i32
    %c0_i32_1 = arith.constant 0 : i32
    return %c0_i32, %c0_i32_0 : i32, i32
  }
  func.func @transform_2(%arg0: i32) -> (i32, i32) {
    %c0_i32 = arith.constant 0 : i32
    %c0_i32_0 = arith.constant 0 : i32
    %c0_i32_1 = arith.constant 0 : i32
    return %c0_i32, %c0_i32_0 : i32, i32
  }
  func.func @transform_3(%arg0: i32) -> (i32, i32) {
    %c0_i32 = arith.constant 0 : i32
    %c0_i32_0 = arith.constant 0 : i32
    %c0_i32_1 = arith.constant 0 : i32
    return %c0_i32, %c0_i32_0 : i32, i32
  }
  func.func @transform_4(%arg0: i32) -> (i32, i32) {
    %c0_i32 = arith.constant 0 : i32
    %c0_i32_0 = arith.constant 0 : i32
    %c0_i32_1 = arith.constant 0 : i32
    return %c0_i32, %c0_i32_0 : i32, i32
  }
  func.func @transform_5(%arg0: i32) -> (i32, i32) {
    %c0_i32 = arith.constant 0 : i32
    %c0_i32_0 = arith.constant 0 : i32
    %c0_i32_1 = arith.constant 0 : i32
    return %c0_i32, %c0_i32_0 : i32, i32
  }
  func.func @transform_6(%arg0: i32) -> (i32, i32) {
    %c0_i32 = arith.constant 0 : i32
    %c0_i32_0 = arith.constant 0 : i32
    %c0_i32_1 = arith.constant 0 : i32
    return %c0_i32, %c0_i32_0 : i32, i32
  }
  func.func @transform_7(%arg0: i32) -> (i32, i32) {
    %c0_i32 = arith.constant 0 : i32
    %c0_i32_0 = arith.constant 0 : i32
    return %arg0, %c0_i32 : i32, i32
  }
}

module attributes {stable_mosaic.version = 11 : i64} {
  func.func @_fused_dbn_kernel(%arg0: i32, %arg1: memref<16x256xf32, #tpu.memory_space<vmem>>, %arg2: memref<256x128xbf16, #tpu.memory_space<vmem>>, %arg3: memref<1x128xf32, #tpu.memory_space<vmem>>, %arg4: memref<128x128xbf16, #tpu.memory_space<vmem>>, %arg5: memref<1x128xf32, #tpu.memory_space<vmem>>, %arg6: memref<128x128xbf16, #tpu.memory_space<vmem>>, %arg7: memref<1x128xf32, #tpu.memory_space<vmem>>, %arg8: memref<16x128xf32, #tpu.memory_space<vmem>>) attributes {dimension_semantics = [#tpu.dimension_semantics<parallel>], iteration_bounds = array<i64: 1>, scalar_prefetch = 0 : i64, scratch_operands = 0 : i64, tpu.core_type = #tpu.core_type<tc>, window_params = [{transform_indices = @transform_0, window_bounds = array<i64: 16, 256>}, {pipeline_mode = #tpu.pipeline_mode<synchronous>, transform_indices = @transform_1, window_bounds = array<i64: 256, 128>}, {pipeline_mode = #tpu.pipeline_mode<synchronous>, transform_indices = @transform_2, window_bounds = array<i64: 1, 128>}, {pipeline_mode = #tpu.pipeline_mode<synchronous>, transform_indices = @transform_3, window_bounds = array<i64: 128, 128>}, {pipeline_mode = #tpu.pipeline_mode<synchronous>, transform_indices = @transform_4, window_bounds = array<i64: 1, 128>}, {pipeline_mode = #tpu.pipeline_mode<synchronous>, transform_indices = @transform_5, window_bounds = array<i64: 128, 128>}, {pipeline_mode = #tpu.pipeline_mode<synchronous>, transform_indices = @transform_6, window_bounds = array<i64: 1, 128>}, {transform_indices = @transform_7, window_bounds = array<i64: 16, 128>}]} {
    %c0 = arith.constant 0 : index
    %c0_0 = arith.constant 0 : index
    %0 = vector.load %arg1[%c0, %c0_0] : memref<16x256xf32, #tpu.memory_space<vmem>>, vector<16x256xf32>
    %1 = arith.truncf %0 : vector<16x256xf32> to vector<16x256xbf16>
    %c0_1 = arith.constant 0 : index
    %c0_2 = arith.constant 0 : index
    %2 = vector.load %arg2[%c0_1, %c0_2] : memref<256x128xbf16, #tpu.memory_space<vmem>>, vector<256x128xbf16>
    %c0_3 = arith.constant 0 : index
    %c0_4 = arith.constant 0 : index
    %3 = vector.load %arg3[%c0_3, %c0_4] : memref<1x128xf32, #tpu.memory_space<vmem>>, vector<1x128xf32>
    %cst = arith.constant dense<0.000000e+00> : vector<16x128xf32>
    %4 = tpu.matmul %1, %2, %cst {dimension_numbers = #tpu.dot_dimension_numbers<[1], [0], [0], [1], [0, 0, 1, 1], [], []>} : vector<16x256xbf16>, vector<256x128xbf16>, vector<16x128xf32> -> vector<16x128xf32>
    %5 = vector.broadcast %3 : vector<1x128xf32> to vector<16x128xf32>
    %6 = arith.addf %4, %5 : vector<16x128xf32>
    %cst_5 = arith.constant 5.000000e-01 : f32
    %7 = vector.broadcast %cst_5 : f32 to vector<16x128xf32>
    %8 = arith.mulf %7, %6 : vector<16x128xf32>
    %9 = math.tanh %8 : vector<16x128xf32>
    %cst_6 = arith.constant 5.000000e-01 : f32
    %10 = vector.broadcast %cst_6 : f32 to vector<16x128xf32>
    %11 = arith.mulf %10, %9 : vector<16x128xf32>
    %cst_7 = arith.constant 5.000000e-01 : f32
    %12 = vector.broadcast %cst_7 : f32 to vector<16x128xf32>
    %13 = arith.addf %11, %12 : vector<16x128xf32>
    %14 = arith.truncf %13 : vector<16x128xf32> to vector<16x128xbf16>
    %c0_8 = arith.constant 0 : index
    %c0_9 = arith.constant 0 : index
    %15 = vector.load %arg4[%c0_8, %c0_9] : memref<128x128xbf16, #tpu.memory_space<vmem>>, vector<128x128xbf16>
    %c0_10 = arith.constant 0 : index
    %c0_11 = arith.constant 0 : index
    %16 = vector.load %arg5[%c0_10, %c0_11] : memref<1x128xf32, #tpu.memory_space<vmem>>, vector<1x128xf32>
    %cst_12 = arith.constant dense<0.000000e+00> : vector<16x128xf32>
    %17 = tpu.matmul %14, %15, %cst_12 {dimension_numbers = #tpu.dot_dimension_numbers<[1], [0], [0], [1], [0, 0, 1, 1], [], []>} : vector<16x128xbf16>, vector<128x128xbf16>, vector<16x128xf32> -> vector<16x128xf32>
    %18 = vector.broadcast %16 : vector<1x128xf32> to vector<16x128xf32>
    %19 = arith.addf %17, %18 : vector<16x128xf32>
    %cst_13 = arith.constant 5.000000e-01 : f32
    %20 = vector.broadcast %cst_13 : f32 to vector<16x128xf32>
    %21 = arith.mulf %20, %19 : vector<16x128xf32>
    %22 = math.tanh %21 : vector<16x128xf32>
    %cst_14 = arith.constant 5.000000e-01 : f32
    %23 = vector.broadcast %cst_14 : f32 to vector<16x128xf32>
    %24 = arith.mulf %23, %22 : vector<16x128xf32>
    %cst_15 = arith.constant 5.000000e-01 : f32
    %25 = vector.broadcast %cst_15 : f32 to vector<16x128xf32>
    %26 = arith.addf %24, %25 : vector<16x128xf32>
    %27 = arith.truncf %26 : vector<16x128xf32> to vector<16x128xbf16>
    %c0_16 = arith.constant 0 : index
    %c0_17 = arith.constant 0 : index
    %28 = vector.load %arg6[%c0_16, %c0_17] : memref<128x128xbf16, #tpu.memory_space<vmem>>, vector<128x128xbf16>
    %c0_18 = arith.constant 0 : index
    %c0_19 = arith.constant 0 : index
    %29 = vector.load %arg7[%c0_18, %c0_19] : memref<1x128xf32, #tpu.memory_space<vmem>>, vector<1x128xf32>
    %cst_20 = arith.constant dense<0.000000e+00> : vector<16x128xf32>
    %30 = tpu.matmul %27, %28, %cst_20 {dimension_numbers = #tpu.dot_dimension_numbers<[1], [0], [0], [1], [0, 0, 1, 1], [], []>} : vector<16x128xbf16>, vector<128x128xbf16>, vector<16x128xf32> -> vector<16x128xf32>
    %31 = vector.broadcast %29 : vector<1x128xf32> to vector<16x128xf32>
    %32 = arith.addf %30, %31 : vector<16x128xf32>
    %c0_21 = arith.constant 0 : index
    %c0_22 = arith.constant 0 : index
    %33 = vector.load %arg8[%c0_21, %c0_22] : memref<16x128xf32, #tpu.memory_space<vmem>>, vector<16x128xf32>
    tpu.vector_store %arg8[%c0_21, %c0_22], %32 {strides = array<i32>} : memref<16x128xf32, #tpu.memory_space<vmem>>, vector<16x128xf32>,
    return
  }
  func.func @transform_0(%arg0: i32) -> (i32, i32) {
    %c0_i32 = arith.constant 0 : i32
    %c0_i32_0 = arith.constant 0 : i32
    return %arg0, %c0_i32 : i32, i32
  }
  func.func @transform_1(%arg0: i32) -> (i32, i32) {
    %c0_i32 = arith.constant 0 : i32
    %c0_i32_0 = arith.constant 0 : i32
    %c0_i32_1 = arith.constant 0 : i32
    return %c0_i32, %c0_i32_0 : i32, i32
  }
  func.func @transform_2(%arg0: i32) -> (i32, i32) {
    %c0_i32 = arith.constant 0 : i32
    %c0_i32_0 = arith.constant 0 : i32
    %c0_i32_1 = arith.constant 0 : i32
    return %c0_i32, %c0_i32_0 : i32, i32
  }
  func.func @transform_3(%arg0: i32) -> (i32, i32) {
    %c0_i32 = arith.constant 0 : i32
    %c0_i32_0 = arith.constant 0 : i32
    %c0_i32_1 = arith.constant 0 : i32
    return %c0_i32, %c0_i32_0 : i32, i32
  }
  func.func @transform_4(%arg0: i32) -> (i32, i32) {
    %c0_i32 = arith.constant 0 : i32
    %c0_i32_0 = arith.constant 0 : i32
    %c0_i32_1 = arith.constant 0 : i32
    return %c0_i32, %c0_i32_0 : i32, i32
  }
  func.func @transform_5(%arg0: i32) -> (i32, i32) {
    %c0_i32 = arith.constant 0 : i32
    %c0_i32_0 = arith.constant 0 : i32
    %c0_i32_1 = arith.constant 0 : i32
    return %c0_i32, %c0_i32_0 : i32, i32
  }
  func.func @transform_6(%arg0: i32) -> (i32, i32) {
    %c0_i32 = arith.constant 0 : i32
    %c0_i32_0 = arith.constant 0 : i32
    %c0_i32_1 = arith.constant 0 : i32
    return %c0_i32, %c0_i32_0 : i32, i32
  }
  func.func @transform_7(%arg0: i32) -> (i32, i32) {
    %c0_i32 = arith.constant 0 : i32
    %c0_i32_0 = arith.constant 0 : i32
    return %arg0, %c0_i32 : i32, i32
  }
}

</mosaic_0001>

<llo_original>
// kernel: _dbn_forward_impl.1
$region0: #{_dbn_forward_impl.1}
  #allocation0 [shape = 'u32[]', space=smem, size = 0x4, offset = 0x4, fixed_abs, tag = 'smem constant byte address 0x4 - core index']
  #allocation1 [shape = 'u32[72,128]{1,0:T(1,128)}', space=vmem, size = 0x9000, scoped, tag = 'internal scratch']
  %s0 = inlined_call_operand.hbm [shape: f32[16,256], index: 0, kind: input, shape index: {}]
  %s1 = inlined_call_operand.hbm [shape: bf16[256,128], index: 1, kind: input, shape index: {}]
  %s2 = inlined_call_operand.vmem [shape: f32[1,128], index: 2, kind: input, shape index: {}]
  %s3 = inlined_call_operand.hbm [shape: bf16[128,128], index: 3, kind: input, shape index: {}]
  %s4 = inlined_call_operand.vmem [shape: f32[1,128], index: 4, kind: input, shape index: {}]
  %s5 = inlined_call_operand.hbm [shape: bf16[128,128], index: 5, kind: input, shape index: {}]
  %s6 = inlined_call_operand.vmem [shape: f32[1,128], index: 6, kind: input, shape index: {}]
  %s7 = inlined_call_operand.vmem [shape: f32[16,128], index: 7, kind: output, shape index: {}]
  %s8 = sld [smem:[#allocation0]]
  $region54: #{_dbn_forward_impl.1} parent=0
    _
  %s10 = ssub.s32 1, %s8
  %s11 = scalar_select 0, %s10, %s8
  $region1: #{_dbn_forward_impl.1} parent=0
    #allocation2 [shape = 'u8[16384]{0}', space=vmem, size = 0x4000, scoped, tag = 'input window, operand 0, single buffered']
    #allocation3 [shape = 's32[1]{0}', space=sflag, size = 0x4, scoped, tag = 'scoped memory for _dbn_forward_impl.1']
    #allocation4 [shape = 'u8[65536]{0}', space=vmem, size = 0x10000, scoped, tag = 'input window, operand 1, single buffered']
    #allocation5 [shape = 's32[1]{0}', space=sflag, size = 0x4, scoped, tag = 'scoped memory for _dbn_forward_impl.1']
    #allocation6 [shape = 'u8[32768]{0}', space=vmem, size = 0x8000, scoped, tag = 'input window, operand 3, single buffered']
    #allocation7 [shape = 'u8[32768]{0}', space=vmem, size = 0x8000, scoped, tag = 'input window, operand 5, single buffered']
    #allocation8 [shape = 's32[1]{0}', space=sflag, size = 0x4, scoped, tag = 'scoped memory for _dbn_forward_impl.1']
    %12 = vsyncpa [#allocation3], 0
    %13 = vsyncpa [#allocation5], 0
    %14 = vsyncpa [#allocation8], 0
    // Predicated region
    $region2: #{_dbn_forward_impl.1} parent=1 // pred_check
      _
    $region3: #{_dbn_forward_impl.1} parent=1 // pred_check_branch
      %16 = sbr.rel (0) target = $region5
    $region4: #{_dbn_forward_impl.1} parent=1 // pred_region
      %18 = vsyncadd [#allocation3], 0
      %s19 = sshll.u32 %s0, 4
      %s20 = int_to_ptr.hbm [resolvable:$true] %s19
      %s21 = sshll.u32 [#allocation2], 4
      %s22 = int_to_ptr.vmem [resolvable:$true] %s21
      %27 = dma.hbm_to_vmem [thread:$0]  %s20, 512, %s22, [#allocation3], 256, 256, 16
    $region5: #{_dbn_forward_impl.1} parent=1 // pred_fallthru
      _
    // Predicated region
    $region6: #{_dbn_forward_impl.1} parent=1 // pred_check
      _
    $region7: #{_dbn_forward_impl.1} parent=1 // pred_check_branch
      %29 = sbr.rel (0) target = $region9
    $region8: #{_dbn_forward_impl.1} parent=1 // pred_region
      %31 = vsyncadd [#allocation5], 0
      %s32 = sshll.u32 %s1, 4
      %s33 = int_to_ptr.hbm [resolvable:$true] %s32
      %s34 = sshll.u32 [#allocation4], 4
      %s35 = int_to_ptr.vmem [resolvable:$true] %s34
      %40 = dma.hbm_to_vmem [thread:$0]  %s33, 2048, %s35, [#allocation5], 64, 64, 4
    $region9: #{_dbn_forward_impl.1} parent=1 // pred_fallthru
      _
    // Predicated region
    $region10: #{_dbn_forward_impl.1} parent=1 // pred_check
      _
    $region11: #{_dbn_forward_impl.1} parent=1 // pred_check_branch
      %42 = sbr.rel (0) target = $region13
    $region12: #{_dbn_forward_impl.1} parent=1 // pred_region
      _
    $region13: #{_dbn_forward_impl.1} parent=1 // pred_fallthru
      _
    // Predicated region
    $region14: #{_dbn_forward_impl.1} parent=1 // pred_check
      _
    $region15: #{_dbn_forward_impl.1} parent=1 // pred_check_branch
      %44 = sbr.rel (0) target = $region17
    $region16: #{_dbn_forward_impl.1} parent=1 // pred_region
      %46 = vsyncadd [#allocation5], 0
      %s47 = sshll.u32 %s3, 4
      %s48 = int_to_ptr.hbm [resolvable:$true] %s47
      %s49 = sshll.u32 [#allocation6], 4
      %s50 = int_to_ptr.vmem [resolvable:$true] %s49
      %55 = dma.hbm_to_vmem [thread:$0]  %s48, 1024, %s50, [#allocation5], 64, 64, 4
    $region17: #{_dbn_forward_impl.1} parent=1 // pred_fallthru
      _
    // Predicated region
    $region18: #{_dbn_forward_impl.1} parent=1 // pred_check
      _
    $region19: #{_dbn_forward_impl.1} parent=1 // pred_check_branch
      %57 = sbr.rel (0) target = $region21
    $region20: #{_dbn_forward_impl.1} parent=1 // pred_region
      _
    $region21: #{_dbn_forward_impl.1} parent=1 // pred_fallthru
      _
    // Predicated region
    $region22: #{_dbn_forward_impl.1} parent=1 // pred_check
      _
    $region23: #{_dbn_forward_impl.1} parent=1 // pred_check_branch
      %59 = sbr.rel (0) target = $region25
    $region24: #{_dbn_forward_impl.1} parent=1 // pred_region
      %61 = vsyncadd [#allocation8], 0
      %s62 = sshll.u32 %s5, 4
      %s63 = int_to_ptr.hbm [resolvable:$true] %s62
      %s64 = sshll.u32 [#allocation7], 4
      %s65 = int_to_ptr.vmem [resolvable:$true] %s64
      %70 = dma.hbm_to_vmem [thread:$0]  %s63, 1024, %s65, [#allocation8], 64, 64, 4
    $region25: #{_dbn_forward_impl.1} parent=1 // pred_fallthru
      _
    // Predicated region
    $region26: #{_dbn_forward_impl.1} parent=1 // pred_check
      _
    $region27: #{_dbn_forward_impl.1} parent=1 // pred_check_branch
      %72 = sbr.rel (0) target = $region29
    $region28: #{_dbn_forward_impl.1} parent=1 // pred_region
      _
    $region29: #{_dbn_forward_impl.1} parent=1 // pred_fallthru
      _
    // Predicated region
    $region30: #{_dbn_forward_impl.1} parent=1 // pred_check
      _
    $region31: #{_dbn_forward_impl.1} parent=1 // pred_check_branch
      %74 = sbr.rel (0) target = $region33
    $region32: #{_dbn_forward_impl.1} parent=1 // pred_region
      %76 = dma.done [#allocation3], 512
    $region33: #{_dbn_forward_impl.1} parent=1 // pred_fallthru
      _
    // Predicated region
    $region34: #{_dbn_forward_impl.1} parent=1 // pred_check
      _
    $region35: #{_dbn_forward_impl.1} parent=1 // pred_check_branch
      %78 = sbr.rel (0) target = $region37
    $region36: #{_dbn_forward_impl.1} parent=1 // pred_region
      %80 = dma.done [#allocation5], 2048
    $region37: #{_dbn_forward_impl.1} parent=1 // pred_fallthru
      _
    // Predicated region
    $region38: #{_dbn_forward_impl.1} parent=1 // pred_check
      _
    $region39: #{_dbn_forward_impl.1} parent=1 // pred_check_branch
      %82 = sbr.rel (0) target = $region41
    $region40: #{_dbn_forward_impl.1} parent=1 // pred_region
      %84 = dma.done [#allocation5], 1024
    $region41: #{_dbn_forward_impl.1} parent=1 // pred_fallthru
      _
    // Predicated region
    $region42: #{_dbn_forward_impl.1} parent=1 // pred_check
      _
    $region43: #{_dbn_forward_impl.1} parent=1 // pred_check_branch
      %86 = sbr.rel (0) target = $region45
    $region44: #{_dbn_forward_impl.1} parent=1 // pred_region
      %88 = dma.done [#allocation8], 1024
    $region45: #{_dbn_forward_impl.1} parent=1 // pred_fallthru
      _
    %v89 = vld [vmem:[#allocation2] sm:$0xff]
    %v90 = vld [vmem:[#allocation2 + $0x8] sm:$0xff]
    %v91 = vld [vmem:[#allocation2 + $0x10] sm:$0xff]
    %v92 = vld [vmem:[#allocation2 + $0x18] sm:$0xff]
    %v93 = vpack.c.bf16 %v91, %v89
    %v94 = vpack.c.bf16 %v92, %v90
    %v95 = vld [vmem:[#allocation4] sm:$0xf]
    %v96 = vld [vmem:[#allocation4 + $0x4] sm:$0xf]
    %v97 = vld [vmem:[#allocation4 + $0x8] sm:$0xf]
    %v98 = vld [vmem:[#allocation4 + $0xc] sm:$0xf]
    %v99 = vld [vmem:[#allocation4 + $0x10] sm:$0xf]
    %v100 = vld [vmem:[#allocation4 + $0x14] sm:$0xf]
    %v101 = vld [vmem:[#allocation4 + $0x18] sm:$0xf]
    %v102 = vld [vmem:[#allocation4 + $0x1c] sm:$0xf]
    %v103 = vld [vmem:[#allocation4 + $0x20] sm:$0xf]
    %v104 = vld [vmem:[#allocation4 + $0x24] sm:$0xf]
    %v105 = vld [vmem:[#allocation4 + $0x28] sm:$0xf]
    %v106 = vld [vmem:[#allocation4 + $0x2c] sm:$0xf]
    %v107 = vld [vmem:[#allocation4 + $0x30] sm:$0xf]
    %v108 = vld [vmem:[#allocation4 + $0x34] sm:$0xf]
    %v109 = vld [vmem:[#allocation4 + $0x38] sm:$0xf]
    %v110 = vld [vmem:[#allocation4 + $0x3c] sm:$0xf]
    %v111 = vld [vmem:[#allocation4 + $0x40] sm:$0xf]
    %v112 = vld [vmem:[#allocation4 + $0x44] sm:$0xf]
    %v113 = vld [vmem:[#allocation4 + $0x48] sm:$0xf]
    %v114 = vld [vmem:[#allocation4 + $0x4c] sm:$0xf]
    %v115 = vld [vmem:[#allocation4 + $0x50] sm:$0xf]
    %v116 = vld [vmem:[#allocation4 + $0x54] sm:$0xf]
    %v117 = vld [vmem:[#allocation4 + $0x58] sm:$0xf]
    %v118 = vld [vmem:[#allocation4 + $0x5c] sm:$0xf]
    %v119 = vld [vmem:[#allocation4 + $0x60] sm:$0xf]
    %v120 = vld [vmem:[#allocation4 + $0x64] sm:$0xf]
    %v121 = vld [vmem:[#allocation4 + $0x68] sm:$0xf]
    %v122 = vld [vmem:[#allocation4 + $0x6c] sm:$0xf]
    %v123 = vld [vmem:[#allocation4 + $0x70] sm:$0xf]
    %v124 = vld [vmem:[#allocation4 + $0x74] sm:$0xf]
    %v125 = vld [vmem:[#allocation4 + $0x78] sm:$0xf]
    %v126 = vld [vmem:[#allocation4 + $0x7c] sm:$0xf]
    %v127 = vld [vmem:[%s2] sm:$0x1]
    %v129 = vperm.slane %v127, 0
    %v163 = vunpack.c.l.b16 %v95
    %v164 = vunpack.c.l.b16 %v96
    %v165 = vunpack.c.l.b16 %v97
    %v166 = vunpack.c.l.b16 %v98
    %v167 = vunpack.c.l.b16 %v99
    %v168 = vunpack.c.l.b16 %v100
    %v169 = vunpack.c.l.b16 %v101
    %v170 = vunpack.c.l.b16 %v102
    %v171 = vunpack.c.l.b16 %v103
    %v172 = vunpack.c.l.b16 %v104
    %v173 = vunpack.c.l.b16 %v105
    %v174 = vunpack.c.l.b16 %v106
    %v175 = vunpack.c.l.b16 %v107
    %v176 = vunpack.c.l.b16 %v108
    %v177 = vunpack.c.l.b16 %v109
    %v178 = vunpack.c.l.b16 %v110
    %v179 = vunpack.c.l.b16 %v111
    %v180 = vunpack.c.l.b16 %v112
    %v181 = vunpack.c.l.b16 %v113
    %v182 = vunpack.c.l.b16 %v114
    %v183 = vunpack.c.l.b16 %v115
    %v184 = vunpack.c.l.b16 %v116
    %v185 = vunpack.c.l.b16 %v117
    %v186 = vunpack.c.l.b16 %v118
    %v187 = vunpack.c.l.b16 %v119
    %v188 = vunpack.c.l.b16 %v120
    %v189 = vunpack.c.l.b16 %v121
    %v190 = vunpack.c.l.b16 %v122
    %v191 = vunpack.c.l.b16 %v123
    %v192 = vunpack.c.l.b16 %v124
    %v193 = vunpack.c.l.b16 %v125
    %v194 = vunpack.c.l.b16 %v126
    %v195 = vpack.c.b16 %v164, %v163
    %v196 = vpack.c.b16 %v166, %v165
    %v197 = vpack.c.b16 %v168, %v167
    %v198 = vpack.c.b16 %v170, %v169
    %v199 = vpack.c.b16 %v172, %v171
    %v200 = vpack.c.b16 %v174, %v173
    %v201 = vpack.c.b16 %v176, %v175
    %v202 = vpack.c.b16 %v178, %v177
    %v203 = vpack.c.b16 %v180, %v179
    %v204 = vpack.c.b16 %v182, %v181
    %v205 = vpack.c.b16 %v184, %v183
    %v206 = vpack.c.b16 %v186, %v185
    %v207 = vpack.c.b16 %v188, %v187
    %v208 = vpack.c.b16 %v190, %v189
    %v209 = vpack.c.b16 %v192, %v191
    %v210 = vpack.c.b16 %v194, %v193
    %227 = vmatpush.bf16.msra.mxu0 %v202
    %228 = vmatpush.bf16.msra.mxu0 %v201
    %229 = vmatpush.bf16.msra.mxu0 %v200
    %230 = vmatpush.bf16.msra.mxu0 %v199
    %231 = vmatpush.bf16.msra.mxu0 %v198
    %232 = vmatpush.bf16.msra.mxu0 %v197
    %233 = vmatpush.bf16.msra.mxu0 %v196
    %234 = vmatpush.bf16.msra.mxu0 %v195
    %235 = vmatmul.bf16.gmra.mxu0 %v93
    %v236 = vpop.f32.mrf.mxu0
    %v237 = vadd.f32 %v129, %v236
    %v238 = vpop.f32.mrf.mxu0
    %v239 = vadd.f32 %v129, %v238
    %240 = vdwg.mxu0
    %241 = vmatpush.bf16.msra.mxu0 %v210
    %242 = vmatpush.bf16.msra.mxu0 %v209
    %243 = vmatpush.bf16.msra.mxu0 %v208
    %244 = vmatpush.bf16.msra.mxu0 %v207
    %245 = vmatpush.bf16.msra.mxu0 %v206
    %246 = vmatpush.bf16.msra.mxu0 %v205
    %247 = vmatpush.bf16.msra.mxu0 %v204
    %248 = vmatpush.bf16.msra.mxu0 %v203
    %249 = vmatmul.bf16.gmra.mxu0 %v94
    %v250 = vpop.f32.mrf.mxu0
    %v251 = vadd.f32 %v237, %v250
    %v252 = vpop.f32.mrf.mxu0
    %v253 = vadd.f32 %v239, %v252
    %254 = vdwg.mxu0
    %v255 = vmul.f32 %v251, 0.5
    %v256 = vmul.f32 %v253, 0.5
    %v257 = vtanh.pop %v255
    %v258 = vtanh.pop %v256
    %v259 = vmul.f32 %v257, 0.5
    %v260 = vmul.f32 %v258, 0.5
    %v261 = vadd.f32 %v259, 0.5
    %v262 = vadd.f32 %v260, 0.5
    %v263 = vpack.c.bf16 %v262, %v261
    %v264 = vld [vmem:[#allocation6] sm:$0xf]
    %v265 = vld [vmem:[#allocation6 + $0x4] sm:$0xf]
    %v266 = vld [vmem:[#allocation6 + $0x8] sm:$0xf]
    %v267 = vld [vmem:[#allocation6 + $0xc] sm:$0xf]
    %v268 = vld [vmem:[#allocation6 + $0x10] sm:$0xf]
    %v269 = vld [vmem:[#allocation6 + $0x14] sm:$0xf]
    %v270 = vld [vmem:[#allocation6 + $0x18] sm:$0xf]
    %v271 = vld [vmem:[#allocation6 + $0x1c] sm:$0xf]
    %v272 = vld [vmem:[#allocation6 + $0x20] sm:$0xf]
    %v273 = vld [vmem:[#allocation6 + $0x24] sm:$0xf]
    %v274 = vld [vmem:[#allocation6 + $0x28] sm:$0xf]
    %v275 = vld [vmem:[#allocation6 + $0x2c] sm:$0xf]
    %v276 = vld [vmem:[#allocation6 + $0x30] sm:$0xf]
    %v277 = vld [vmem:[#allocation6 + $0x34] sm:$0xf]
    %v278 = vld [vmem:[#allocation6 + $0x38] sm:$0xf]
    %v279 = vld [vmem:[#allocation6 + $0x3c] sm:$0xf]
    %v280 = vld [vmem:[%s4] sm:$0x1]
    %v282 = vperm.slane %v280, 0
    %v300 = vunpack.c.l.b16 %v264
    %v301 = vunpack.c.l.b16 %v265
    %v302 = vunpack.c.l.b16 %v266
    %v303 = vunpack.c.l.b16 %v267
    %v304 = vunpack.c.l.b16 %v268
    %v305 = vunpack.c.l.b16 %v269
    %v306 = vunpack.c.l.b16 %v270
    %v307 = vunpack.c.l.b16 %v271
    %v308 = vunpack.c.l.b16 %v272
    %v309 = vunpack.c.l.b16 %v273
    %v310 = vunpack.c.l.b16 %v274
    %v311 = vunpack.c.l.b16 %v275
    %v312 = vunpack.c.l.b16 %v276
    %v313 = vunpack.c.l.b16 %v277
    %v314 = vunpack.c.l.b16 %v278
    %v315 = vunpack.c.l.b16 %v279
    %v316 = vpack.c.b16 %v301, %v300
    %v317 = vpack.c.b16 %v303, %v302
    %v318 = vpack.c.b16 %v305, %v304
    %v319 = vpack.c.b16 %v307, %v306
    %v320 = vpack.c.b16 %v309, %v308
    %v321 = vpack.c.b16 %v311, %v310
    %v322 = vpack.c.b16 %v313, %v312
    %v323 = vpack.c.b16 %v315, %v314
    %332 = vmatpush.bf16.msra.mxu0 %v323
    %333 = vmatpush.bf16.msra.mxu0 %v322
    %334 = vmatpush.bf16.msra.mxu0 %v321
    %335 = vmatpush.bf16.msra.mxu0 %v320
    %336 = vmatpush.bf16.msra.mxu0 %v319
    %337 = vmatpush.bf16.msra.mxu0 %v318
    %338 = vmatpush.bf16.msra.mxu0 %v317
    %339 = vmatpush.bf16.msra.mxu0 %v316
    %340 = vmatmul.bf16.gmra.mxu0 %v263
    %v341 = vpop.f32.mrf.mxu0
    %v342 = vadd.f32 %v282, %v341
    %v343 = vpop.f32.mrf.mxu0
    %v344 = vadd.f32 %v282, %v343
    %345 = vdwg.mxu0
    %v346 = vmul.f32 %v342, 0.5
    %v347 = vmul.f32 %v344, 0.5
    %v348 = vtanh.pop %v346
    %v349 = vtanh.pop %v347
    %v350 = vmul.f32 %v348, 0.5
    %v351 = vmul.f32 %v349, 0.5
    %v352 = vadd.f32 %v350, 0.5
    %v353 = vadd.f32 %v351, 0.5
    %v354 = vpack.c.bf16 %v353, %v352
    %v355 = vld [vmem:[#allocation7] sm:$0xf]
    %v356 = vld [vmem:[#allocation7 + $0x4] sm:$0xf]
    %v357 = vld [vmem:[#allocation7 + $0x8] sm:$0xf]
    %v358 = vld [vmem:[#allocation7 + $0xc] sm:$0xf]
    %v359 = vld [vmem:[#allocation7 + $0x10] sm:$0xf]
    %v360 = vld [vmem:[#allocation7 + $0x14] sm:$0xf]
    %v361 = vld [vmem:[#allocation7 + $0x18] sm:$0xf]
    %v362 = vld [vmem:[#allocation7 + $0x1c] sm:$0xf]
    %v363 = vld [vmem:[#allocation7 + $0x20] sm:$0xf]
    %v364 = vld [vmem:[#allocation7 + $0x24] sm:$0xf]
    %v365 = vld [vmem:[#allocation7 + $0x28] sm:$0xf]
    %v366 = vld [vmem:[#allocation7 + $0x2c] sm:$0xf]
    %v367 = vld [vmem:[#allocation7 + $0x30] sm:$0xf]
    %v368 = vld [vmem:[#allocation7 + $0x34] sm:$0xf]
    %v369 = vld [vmem:[#allocation7 + $0x38] sm:$0xf]
    %v370 = vld [vmem:[#allocation7 + $0x3c] sm:$0xf]
    %v371 = vld [vmem:[%s6] sm:$0x1]
    %v373 = vperm.slane %v371, 0
    %v391 = vunpack.c.l.b16 %v355
    %v392 = vunpack.c.l.b16 %v356
    %v393 = vunpack.c.l.b16 %v357
    %v394 = vunpack.c.l.b16 %v358
    %v395 = vunpack.c.l.b16 %v359
    %v396 = vunpack.c.l.b16 %v360
    %v397 = vunpack.c.l.b16 %v361
    %v398 = vunpack.c.l.b16 %v362
    %v399 = vunpack.c.l.b16 %v363
    %v400 = vunpack.c.l.b16 %v364
    %v401 = vunpack.c.l.b16 %v365
    %v402 = vunpack.c.l.b16 %v366
    %v403 = vunpack.c.l.b16 %v367
    %v404 = vunpack.c.l.b16 %v368
    %v405 = vunpack.c.l.b16 %v369
    %v406 = vunpack.c.l.b16 %v370
    %v407 = vpack.c.b16 %v392, %v391
    %v408 = vpack.c.b16 %v394, %v393
    %v409 = vpack.c.b16 %v396, %v395
    %v410 = vpack.c.b16 %v398, %v397
    %v411 = vpack.c.b16 %v400, %v399
    %v412 = vpack.c.b16 %v402, %v401
    %v413 = vpack.c.b16 %v404, %v403
    %v414 = vpack.c.b16 %v406, %v405
    %423 = vmatpush.bf16.msra.mxu0 %v414
    %424 = vmatpush.bf16.msra.mxu0 %v413
    %425 = vmatpush.bf16.msra.mxu0 %v412
    %426 = vmatpush.bf16.msra.mxu0 %v411
    %427 = vmatpush.bf16.msra.mxu0 %v410
    %428 = vmatpush.bf16.msra.mxu0 %v409
    %429 = vmatpush.bf16.msra.mxu0 %v408
    %430 = vmatpush.bf16.msra.mxu0 %v407
    %431 = vmatmul.bf16.gmra.mxu0 %v354
    %v432 = vpop.f32.mrf.mxu0
    %v433 = vadd.f32 %v373, %v432
    %v434 = vpop.f32.mrf.mxu0
    %v435 = vadd.f32 %v373, %v434
    %436 = vdwg.mxu0
    %437 = vst [vmem:[%s7] sm:$0xff] %v433
    %438 = vst [vmem:[%s7 + $0x8] sm:$0xff] %v435
    // Predicated region
    $region46: #{_dbn_forward_impl.1} parent=1 // pred_check
      _
    $region47: #{_dbn_forward_impl.1} parent=1 // pred_check_branch
      %440 = sbr.rel (0) target = $region49
    $region48: #{_dbn_forward_impl.1} parent=1 // pred_region
      _
    $region49: #{_dbn_forward_impl.1} parent=1 // pred_fallthru
      _
    // Predicated region
    $region50: #{_dbn_forward_impl.1} parent=1 // pred_check
      _
    $region51: #{_dbn_forward_impl.1} parent=1 // pred_check_branch
      %442 = sbr.rel (0) target = $region53
    $region52: #{_dbn_forward_impl.1} parent=1 // pred_region
      _
    $region53: #{_dbn_forward_impl.1} parent=1 // pred_fallthru
      _
    %443 = vsyncpa [#allocation3], 1
    %444 = vsyncpa [#allocation5], 1
    %445 = vsyncpa [#allocation8], 1

// kernel: _dbn_forward_impl.1
$region0: #{_dbn_forward_impl.1}
  #allocation0 [shape = 'u32[]', space=smem, size = 0x4, offset = 0x4, fixed_abs, tag = 'smem constant byte address 0x4 - core index']
  #allocation1 [shape = 'u32[72,128]{1,0:T(1,128)}', space=vmem, size = 0x9000, scoped, tag = 'internal scratch']
  %s0 = inlined_call_operand.hbm [shape: f32[16,256], index: 0, kind: input, shape index: {}]
  %s1 = inlined_call_operand.hbm [shape: bf16[256,128], index: 1, kind: input, shape index: {}]
  %s2 = inlined_call_operand.vmem [shape: f32[1,128], index: 2, kind: input, shape index: {}]
  %s3 = inlined_call_operand.hbm [shape: bf16[128,128], index: 3, kind: input, shape index: {}]
  %s4 = inlined_call_operand.vmem [shape: f32[1,128], index: 4, kind: input, shape index: {}]
  %s5 = inlined_call_operand.hbm [shape: bf16[128,128], index: 5, kind: input, shape index: {}]
  %s6 = inlined_call_operand.vmem [shape: f32[1,128], index: 6, kind: input, shape index: {}]
  %s7 = inlined_call_operand.vmem [shape: f32[16,128], index: 7, kind: output, shape index: {}]
  %s8 = sld [smem:[#allocation0]]
  $region54: #{_dbn_forward_impl.1} parent=0
    _
  %s10 = ssub.s32 1, %s8
  %s11 = scalar_select 0, %s10, %s8
  $region1: #{_dbn_forward_impl.1} parent=0
    #allocation2 [shape = 'u8[16384]{0}', space=vmem, size = 0x4000, scoped, tag = 'input window, operand 0, single buffered']
    #allocation3 [shape = 's32[1]{0}', space=sflag, size = 0x4, scoped, tag = 'scoped memory for _dbn_forward_impl.1']
    #allocation4 [shape = 'u8[65536]{0}', space=vmem, size = 0x10000, scoped, tag = 'input window, operand 1, single buffered']
    #allocation5 [shape = 's32[1]{0}', space=sflag, size = 0x4, scoped, tag = 'scoped memory for _dbn_forward_impl.1']
    #allocation6 [shape = 'u8[32768]{0}', space=vmem, size = 0x8000, scoped, tag = 'input window, operand 3, single buffered']
    #allocation7 [shape = 'u8[32768]{0}', space=vmem, size = 0x8000, scoped, tag = 'input window, operand 5, single buffered']
    #allocation8 [shape = 's32[1]{0}', space=sflag, size = 0x4, scoped, tag = 'scoped memory for _dbn_forward_impl.1']
    %12 = vsyncpa [#allocation3], 0
    %13 = vsyncpa [#allocation5], 0
    %14 = vsyncpa [#allocation8], 0
    // Predicated region
    $region2: #{_dbn_forward_impl.1} parent=1 // pred_check
      _
    $region3: #{_dbn_forward_impl.1} parent=1 // pred_check_branch
      %16 = sbr.rel (0) target = $region5
    $region4: #{_dbn_forward_impl.1} parent=1 // pred_region
      %18 = vsyncadd [#allocation3], 0
      %s19 = sshll.u32 %s0, 4
      %s20 = int_to_ptr.hbm [resolvable:$true] %s19
      %s21 = sshll.u32 [#allocation2], 4
      %s22 = int_to_ptr.vmem [resolvable:$true] %s21
      %27 = dma.hbm_to_vmem [thread:$0]  %s20, 512, %s22, [#allocation3], 256, 256, 16
    $region5: #{_dbn_forward_impl.1} parent=1 // pred_fallthru
      _
    // Predicated region
    $region6: #{_dbn_forward_impl.1} parent=1 // pred_check
      _
    $region7: #{_dbn_forward_impl.1} parent=1 // pred_check_branch
      %29 = sbr.rel (0) target = $region9
    $region8: #{_dbn_forward_impl.1} parent=1 // pred_region
      %31 = vsyncadd [#allocation5], 0
      %s32 = sshll.u32 %s1, 4
      %s33 = int_to_ptr.hbm [resolvable:$true] %s32
      %s34 = sshll.u32 [#allocation4], 4
      %s35 = int_to_ptr.vmem [resolvable:$true] %s34
      %40 = dma.hbm_to_vmem [thread:$0]  %s33, 2048, %s35, [#allocation5], 64, 64, 4
    $region9: #{_dbn_forward_impl.1} parent=1 // pred_fallthru
      _
    // Predicated region
    $region10: #{_dbn_forward_impl.1} parent=1 // pred_check
      _
    $region11: #{_dbn_forward_impl.1} parent=1 // pred_check_branch
      %42 = sbr.rel (0) target = $region13
    $region12: #{_dbn_forward_impl.1} parent=1 // pred_region
      _
    $region13: #{_dbn_forward_impl.1} parent=1 // pred_fallthru
      _
    // Predicated region
    $region14: #{_dbn_forward_impl.1} parent=1 // pred_check
      _
    $region15: #{_dbn_forward_impl.1} parent=1 // pred_check_branch
      %44 = sbr.rel (0) target = $region17
    $region16: #{_dbn_forward_impl.1} parent=1 // pred_region
      %46 = vsyncadd [#allocation5], 0
      %s47 = sshll.u32 %s3, 4
      %s48 = int_to_ptr.hbm [resolvable:$true] %s47
      %s49 = sshll.u32 [#allocation6], 4
      %s50 = int_to_ptr.vmem [resolvable:$true] %s49
      %55 = dma.hbm_to_vmem [thread:$0]  %s48, 1024, %s50, [#allocation5], 64, 64, 4
    $region17: #{_dbn_forward_impl.1} parent=1 // pred_fallthru
      _
    // Predicated region
    $region18: #{_dbn_forward_impl.1} parent=1 // pred_check
      _
    $region19: #{_dbn_forward_impl.1} parent=1 // pred_check_branch
      %57 = sbr.rel (0) target = $region21
    $region20: #{_dbn_forward_impl.1} parent=1 // pred_region
      _
    $region21: #{_dbn_forward_impl.1} parent=1 // pred_fallthru
      _
    // Predicated region
    $region22: #{_dbn_forward_impl.1} parent=1 // pred_check
      _
    $region23: #{_dbn_forward_impl.1} parent=1 // pred_check_branch
      %59 = sbr.rel (0) target = $region25
    $region24: #{_dbn_forward_impl.1} parent=1 // pred_region
      %61 = vsyncadd [#allocation8], 0
      %s62 = sshll.u32 %s5, 4
      %s63 = int_to_ptr.hbm [resolvable:$true] %s62
      %s64 = sshll.u32 [#allocation7], 4
      %s65 = int_to_ptr.vmem [resolvable:$true] %s64
      %70 = dma.hbm_to_vmem [thread:$0]  %s63, 1024, %s65, [#allocation8], 64, 64, 4
    $region25: #{_dbn_forward_impl.1} parent=1 // pred_fallthru
      _
    // Predicated region
    $region26: #{_dbn_forward_impl.1} parent=1 // pred_check
      _
    $region27: #{_dbn_forward_impl.1} parent=1 // pred_check_branch
      %72 = sbr.rel (0) target = $region29
    $region28: #{_dbn_forward_impl.1} parent=1 // pred_region
      _
    $region29: #{_dbn_forward_impl.1} parent=1 // pred_fallthru
      _
    // Predicated region
    $region30: #{_dbn_forward_impl.1} parent=1 // pred_check
      _
    $region31: #{_dbn_forward_impl.1} parent=1 // pred_check_branch
      %74 = sbr.rel (0) target = $region33
    $region32: #{_dbn_forward_impl.1} parent=1 // pred_region
      %76 = dma.done [#allocation3], 512
    $region33: #{_dbn_forward_impl.1} parent=1 // pred_fallthru
      _
    // Predicated region
    $region34: #{_dbn_forward_impl.1} parent=1 // pred_check
      _
    $region35: #{_dbn_forward_impl.1} parent=1 // pred_check_branch
      %78 = sbr.rel (0) target = $region37
    $region36: #{_dbn_forward_impl.1} parent=1 // pred_region
      %80 = dma.done [#allocation5], 2048
    $region37: #{_dbn_forward_impl.1} parent=1 // pred_fallthru
      _
    // Predicated region
    $region38: #{_dbn_forward_impl.1} parent=1 // pred_check
      _
    $region39: #{_dbn_forward_impl.1} parent=1 // pred_check_branch
      %82 = sbr.rel (0) target = $region41
    $region40: #{_dbn_forward_impl.1} parent=1 // pred_region
      %84 = dma.done [#allocation5], 1024
    $region41: #{_dbn_forward_impl.1} parent=1 // pred_fallthru
      _
    // Predicated region
    $region42: #{_dbn_forward_impl.1} parent=1 // pred_check
      _
    $region43: #{_dbn_forward_impl.1} parent=1 // pred_check_branch
      %86 = sbr.rel (0) target = $region45
    $region44: #{_dbn_forward_impl.1} parent=1 // pred_region
      %88 = dma.done [#allocation8], 1024
    $region45: #{_dbn_forward_impl.1} parent=1 // pred_fallthru
      _
    %v89 = vld [vmem:[#allocation2] sm:$0xff]
    %v90 = vld [vmem:[#allocation2 + $0x8] sm:$0xff]
    %v91 = vld [vmem:[#allocation2 + $0x10] sm:$0xff]
    %v92 = vld [vmem:[#allocation2 + $0x18] sm:$0xff]
    %v93 = vpack.c.bf16 %v91, %v89
    %v94 = vpack.c.bf16 %v92, %v90
    %v95 = vld [vmem:[#allocation4] sm:$0xf]
    %v96 = vld [vmem:[#allocation4 + $0x4] sm:$0xf]
    %v97 = vld [vmem:[#allocation4 + $0x8] sm:$0xf]
    %v98 = vld [vmem:[#allocation4 + $0xc] sm:$0xf]
    %v99 = vld [vmem:[#allocation4 + $0x10] sm:$0xf]
    %v100 = vld [vmem:[#allocation4 + $0x14] sm:$0xf]
    %v101 = vld [vmem:[#allocation4 + $0x18] sm:$0xf]
    %v102 = vld [vmem:[#allocation4 + $0x1c] sm:$0xf]
    %v103 = vld [vmem:[#allocation4 + $0x20] sm:$0xf]
    %v104 = vld [vmem:[#allocation4 + $0x24] sm:$0xf]
    %v105 = vld [vmem:[#allocation4 + $0x28] sm:$0xf]
    %v106 = vld [vmem:[#allocation4 + $0x2c] sm:$0xf]
    %v107 = vld [vmem:[#allocation4 + $0x30] sm:$0xf]
    %v108 = vld [vmem:[#allocation4 + $0x34] sm:$0xf]
    %v109 = vld [vmem:[#allocation4 + $0x38] sm:$0xf]
    %v110 = vld [vmem:[#allocation4 + $0x3c] sm:$0xf]
    %v111 = vld [vmem:[#allocation4 + $0x40] sm:$0xf]
    %v112 = vld [vmem:[#allocation4 + $0x44] sm:$0xf]
    %v113 = vld [vmem:[#allocation4 + $0x48] sm:$0xf]
    %v114 = vld [vmem:[#allocation4 + $0x4c] sm:$0xf]
    %v115 = vld [vmem:[#allocation4 + $0x50] sm:$0xf]
    %v116 = vld [vmem:[#allocation4 + $0x54] sm:$0xf]
    %v117 = vld [vmem:[#allocation4 + $0x58] sm:$0xf]
    %v118 = vld [vmem:[#allocation4 + $0x5c] sm:$0xf]
    %v119 = vld [vmem:[#allocation4 + $0x60] sm:$0xf]
    %v120 = vld [vmem:[#allocation4 + $0x64] sm:$0xf]
    %v121 = vld [vmem:[#allocation4 + $0x68] sm:$0xf]
    %v122 = vld [vmem:[#allocation4 + $0x6c] sm:$0xf]
    %v123 = vld [vmem:[#allocation4 + $0x70] sm:$0xf]
    %v124 = vld [vmem:[#allocation4 + $0x74] sm:$0xf]
    %v125 = vld [vmem:[#allocation4 + $0x78] sm:$0xf]
    %v126 = vld [vmem:[#allocation4 + $0x7c] sm:$0xf]
    %v127 = vld [vmem:[%s2] sm:$0x1]
    %v129 = vperm.slane %v127, 0
    %v163 = vunpack.c.l.b16 %v95
    %v164 = vunpack.c.l.b16 %v96
    %v165 = vunpack.c.l.b16 %v97
    %v166 = vunpack.c.l.b16 %v98
    %v167 = vunpack.c.l.b16 %v99
    %v168 = vunpack.c.l.b16 %v100
    %v169 = vunpack.c.l.b16 %v101
    %v170 = vunpack.c.l.b16 %v102
    %v171 = vunpack.c.l.b16 %v103
    %v172 = vunpack.c.l.b16 %v104
    %v173 = vunpack.c.l.b16 %v105
    %v174 = vunpack.c.l.b16 %v106
    %v175 = vunpack.c.l.b16 %v107
    %v176 = vunpack.c.l.b16 %v108
    %v177 = vunpack.c.l.b16 %v109
    %v178 = vunpack.c.l.b16 %v110
    %v179 = vunpack.c.l.b16 %v111
    %v180 = vunpack.c.l.b16 %v112
    %v181 = vunpack.c.l.b16 %v113
    %v182 = vunpack.c.l.b16 %v114
    %v183 = vunpack.c.l.b16 %v115
    %v184 = vunpack.c.l.b16 %v116
    %v185 = vunpack.c.l.b16 %v117
    %v186 = vunpack.c.l.b16 %v118
    %v187 = vunpack.c.l.b16 %v119
    %v188 = vunpack.c.l.b16 %v120
    %v189 = vunpack.c.l.b16 %v121
    %v190 = vunpack.c.l.b16 %v122
    %v191 = vunpack.c.l.b16 %v123
    %v192 = vunpack.c.l.b16 %v124
    %v193 = vunpack.c.l.b16 %v125
    %v194 = vunpack.c.l.b16 %v126
    %v195 = vpack.c.b16 %v164, %v163
    %v196 = vpack.c.b16 %v166, %v165
    %v197 = vpack.c.b16 %v168, %v167
    %v198 = vpack.c.b16 %v170, %v169
    %v199 = vpack.c.b16 %v172, %v171
    %v200 = vpack.c.b16 %v174, %v173
    %v201 = vpack.c.b16 %v176, %v175
    %v202 = vpack.c.b16 %v178, %v177
    %v203 = vpack.c.b16 %v180, %v179
    %v204 = vpack.c.b16 %v182, %v181
    %v205 = vpack.c.b16 %v184, %v183
    %v206 = vpack.c.b16 %v186, %v185
    %v207 = vpack.c.b16 %v188, %v187
    %v208 = vpack.c.b16 %v190, %v189
    %v209 = vpack.c.b16 %v192, %v191
    %v210 = vpack.c.b16 %v194, %v193
    %227 = vmatpush.bf16.msra.mxu0 %v202
    %228 = vmatpush.bf16.msra.mxu0 %v201
    %229 = vmatpush.bf16.msra.mxu0 %v200
    %230 = vmatpush.bf16.msra.mxu0 %v199
    %231 = vmatpush.bf16.msra.mxu0 %v198
    %232 = vmatpush.bf16.msra.mxu0 %v197
    %233 = vmatpush.bf16.msra.mxu0 %v196
    %234 = vmatpush.bf16.msra.mxu0 %v195
    %235 = vmatmul.bf16.gmra.mxu0 %v93
    %v236 = vpop.f32.mrf.mxu0
    %v237 = vadd.f32 %v129, %v236
    %v238 = vpop.f32.mrf.mxu0
    %v239 = vadd.f32 %v129, %v238
    %240 = vdwg.mxu0
    %241 = vmatpush.bf16.msra.mxu0 %v210
    %242 = vmatpush.bf16.msra.mxu0 %v209
    %243 = vmatpush.bf16.msra.mxu0 %v208
    %244 = vmatpush.bf16.msra.mxu0 %v207
    %245 = vmatpush.bf16.msra.mxu0 %v206
    %246 = vmatpush.bf16.msra.mxu0 %v205
    %247 = vmatpush.bf16.msra.mxu0 %v204
    %248 = vmatpush.bf16.msra.mxu0 %v203
    %249 = vmatmul.bf16.gmra.mxu0 %v94
    %v250 = vpop.f32.mrf.mxu0
    %v251 = vadd.f32 %v237, %v250
    %v252 = vpop.f32.mrf.mxu0
    %v253 = vadd.f32 %v239, %v252
    %254 = vdwg.mxu0
    %v255 = vmul.f32 %v251, 0.5
    %v256 = vmul.f32 %v253, 0.5
    %v257 = vtanh.pop %v255
    %v258 = vtanh.pop %v256
    %v259 = vmul.f32 %v257, 0.5
    %v260 = vmul.f32 %v258, 0.5
    %v261 = vadd.f32 %v259, 0.5
    %v262 = vadd.f32 %v260, 0.5
    %v263 = vpack.c.bf16 %v262, %v261
    %v264 = vld [vmem:[#allocation6] sm:$0xf]
    %v265 = vld [vmem:[#allocation6 + $0x4] sm:$0xf]
    %v266 = vld [vmem:[#allocation6 + $0x8] sm:$0xf]
    %v267 = vld [vmem:[#allocation6 + $0xc] sm:$0xf]
    %v268 = vld [vmem:[#allocation6 + $0x10] sm:$0xf]
    %v269 = vld [vmem:[#allocation6 + $0x14] sm:$0xf]
    %v270 = vld [vmem:[#allocation6 + $0x18] sm:$0xf]
    %v271 = vld [vmem:[#allocation6 + $0x1c] sm:$0xf]
    %v272 = vld [vmem:[#allocation6 + $0x20] sm:$0xf]
    %v273 = vld [vmem:[#allocation6 + $0x24] sm:$0xf]
    %v274 = vld [vmem:[#allocation6 + $0x28] sm:$0xf]
    %v275 = vld [vmem:[#allocation6 + $0x2c] sm:$0xf]
    %v276 = vld [vmem:[#allocation6 + $0x30] sm:$0xf]
    %v277 = vld [vmem:[#allocation6 + $0x34] sm:$0xf]
    %v278 = vld [vmem:[#allocation6 + $0x38] sm:$0xf]
    %v279 = vld [vmem:[#allocation6 + $0x3c] sm:$0xf]
    %v280 = vld [vmem:[%s4] sm:$0x1]
    %v282 = vperm.slane %v280, 0
    %v300 = vunpack.c.l.b16 %v264
    %v301 = vunpack.c.l.b16 %v265
    %v302 = vunpack.c.l.b16 %v266
    %v303 = vunpack.c.l.b16 %v267
    %v304 = vunpack.c.l.b16 %v268
    %v305 = vunpack.c.l.b16 %v269
    %v306 = vunpack.c.l.b16 %v270
    %v307 = vunpack.c.l.b16 %v271
    %v308 = vunpack.c.l.b16 %v272
    %v309 = vunpack.c.l.b16 %v273
    %v310 = vunpack.c.l.b16 %v274
    %v311 = vunpack.c.l.b16 %v275
    %v312 = vunpack.c.l.b16 %v276
    %v313 = vunpack.c.l.b16 %v277
    %v314 = vunpack.c.l.b16 %v278
    %v315 = vunpack.c.l.b16 %v279
    %v316 = vpack.c.b16 %v301, %v300
    %v317 = vpack.c.b16 %v303, %v302
    %v318 = vpack.c.b16 %v305, %v304
    %v319 = vpack.c.b16 %v307, %v306
    %v320 = vpack.c.b16 %v309, %v308
    %v321 = vpack.c.b16 %v311, %v310
    %v322 = vpack.c.b16 %v313, %v312
    %v323 = vpack.c.b16 %v315, %v314
    %332 = vmatpush.bf16.msra.mxu0 %v323
    %333 = vmatpush.bf16.msra.mxu0 %v322
    %334 = vmatpush.bf16.msra.mxu0 %v321
    %335 = vmatpush.bf16.msra.mxu0 %v320
    %336 = vmatpush.bf16.msra.mxu0 %v319
    %337 = vmatpush.bf16.msra.mxu0 %v318
    %338 = vmatpush.bf16.msra.mxu0 %v317
    %339 = vmatpush.bf16.msra.mxu0 %v316
    %340 = vmatmul.bf16.gmra.mxu0 %v263
    %v341 = vpop.f32.mrf.mxu0
    %v342 = vadd.f32 %v282, %v341
    %v343 = vpop.f32.mrf.mxu0
    %v344 = vadd.f32 %v282, %v343
    %345 = vdwg.mxu0
    %v346 = vmul.f32 %v342, 0.5
    %v347 = vmul.f32 %v344, 0.5
    %v348 = vtanh.pop %v346
    %v349 = vtanh.pop %v347
    %v350 = vmul.f32 %v348, 0.5
    %v351 = vmul.f32 %v349, 0.5
    %v352 = vadd.f32 %v350, 0.5
    %v353 = vadd.f32 %v351, 0.5
    %v354 = vpack.c.bf16 %v353, %v352
    %v355 = vld [vmem:[#allocation7] sm:$0xf]
    %v356 = vld [vmem:[#allocation7 + $0x4] sm:$0xf]
    %v357 = vld [vmem:[#allocation7 + $0x8] sm:$0xf]
    %v358 = vld [vmem:[#allocation7 + $0xc] sm:$0xf]
    %v359 = vld [vmem:[#allocation7 + $0x10] sm:$0xf]
    %v360 = vld [vmem:[#allocation7 + $0x14] sm:$0xf]
    %v361 = vld [vmem:[#allocation7 + $0x18] sm:$0xf]
    %v362 = vld [vmem:[#allocation7 + $0x1c] sm:$0xf]
    %v363 = vld [vmem:[#allocation7 + $0x20] sm:$0xf]
    %v364 = vld [vmem:[#allocation7 + $0x24] sm:$0xf]
    %v365 = vld [vmem:[#allocation7 + $0x28] sm:$0xf]
    %v366 = vld [vmem:[#allocation7 + $0x2c] sm:$0xf]
    %v367 = vld [vmem:[#allocation7 + $0x30] sm:$0xf]
    %v368 = vld [vmem:[#allocation7 + $0x34] sm:$0xf]
    %v369 = vld [vmem:[#allocation7 + $0x38] sm:$0xf]
    %v370 = vld [vmem:[#allocation7 + $0x3c] sm:$0xf]
    %v371 = vld [vmem:[%s6] sm:$0x1]
    %v373 = vperm.slane %v371, 0
    %v391 = vunpack.c.l.b16 %v355
    %v392 = vunpack.c.l.b16 %v356
    %v393 = vunpack.c.l.b16 %v357
    %v394 = vunpack.c.l.b16 %v358
    %v395 = vunpack.c.l.b16 %v359
    %v396 = vunpack.c.l.b16 %v360
    %v397 = vunpack.c.l.b16 %v361
    %v398 = vunpack.c.l.b16 %v362
    %v399 = vunpack.c.l.b16 %v363
    %v400 = vunpack.c.l.b16 %v364
    %v401 = vunpack.c.l.b16 %v365
    %v402 = vunpack.c.l.b16 %v366
    %v403 = vunpack.c.l.b16 %v367
    %v404 = vunpack.c.l.b16 %v368
    %v405 = vunpack.c.l.b16 %v369
    %v406 = vunpack.c.l.b16 %v370
    %v407 = vpack.c.b16 %v392, %v391
    %v408 = vpack.c.b16 %v394, %v393
    %v409 = vpack.c.b16 %v396, %v395
    %v410 = vpack.c.b16 %v398, %v397
    %v411 = vpack.c.b16 %v400, %v399
    %v412 = vpack.c.b16 %v402, %v401
    %v413 = vpack.c.b16 %v404, %v403
    %v414 = vpack.c.b16 %v406, %v405
    %423 = vmatpush.bf16.msra.mxu0 %v414
    %424 = vmatpush.bf16.msra.mxu0 %v413
    %425 = vmatpush.bf16.msra.mxu0 %v412
    %426 = vmatpush.bf16.msra.mxu0 %v411
    %427 = vmatpush.bf16.msra.mxu0 %v410
    %428 = vmatpush.bf16.msra.mxu0 %v409
    %429 = vmatpush.bf16.msra.mxu0 %v408
    %430 = vmatpush.bf16.msra.mxu0 %v407
    %431 = vmatmul.bf16.gmra.mxu0 %v354
    %v432 = vpop.f32.mrf.mxu0
    %v433 = vadd.f32 %v373, %v432
    %v434 = vpop.f32.mrf.mxu0
    %v435 = vadd.f32 %v373, %v434
    %436 = vdwg.mxu0
    %437 = vst [vmem:[%s7] sm:$0xff] %v433
    %438 = vst [vmem:[%s7 + $0x8] sm:$0xff] %v435
    // Predicated region
    $region46: #{_dbn_forward_impl.1} parent=1 // pred_check
      _
    $region47: #{_dbn_forward_impl.1} parent=1 // pred_check_branch
      %440 = sbr.rel (0) target = $region49
    $region48: #{_dbn_forward_impl.1} parent=1 // pred_region
      _
    $region49: #{_dbn_forward_impl.1} parent=1 // pred_fallthru
      _
    // Predicated region
    $region50: #{_dbn_forward_impl.1} parent=1 // pred_check
      _
    $region51: #{_dbn_forward_impl.1} parent=1 // pred_check_branch
      %442 = sbr.rel (0) target = $region53
    $region52: #{_dbn_forward_impl.1} parent=1 // pred_region
      _
    $region53: #{_dbn_forward_impl.1} parent=1 // pred_fallthru
      _
    %443 = vsyncpa [#allocation3], 1
    %444 = vsyncpa [#allocation5], 1
    %445 = vsyncpa [#allocation8], 1

</llo_original>
